<compile_context>
chip_gen: v5e
topology: v5e:2x2
jax: 0.10.0
libtpu: 0.0.40
codegen_flags: <defaults>
</compile_context>

<pallas_src>
import functools

import jax
import jax.numpy as jnp
from jax.experimental import pallas as pl
from jax.experimental.pallas import tpu as pltpu


# ----------------------------------------------------------------------------
# Kernel 1: BatchNorm1d batch statistics -> per-channel scale / shift
#           (single-pass sum / sumsq accumulation, row-tiled grid)
# ----------------------------------------------------------------------------
def bn_stats_kernel(x_ref, gamma_ref, beta_ref, scale_ref, shift_ref,
                    sum_sc, sq_sc, *, n_rows, eps):
    r = pl.program_id(0)

    @pl.when(r == 0)
    def _():
        sum_sc[...] = jnp.zeros_like(sum_sc)
        sq_sc[...] = jnp.zeros_like(sq_sc)

    x = x_ref[...].astype(jnp.float32)                      # (RT, D)
    sum_sc[...] += jnp.sum(x, axis=0, keepdims=True)
    sq_sc[...] += jnp.sum(x * x, axis=0, keepdims=True)

    @pl.when(r == pl.num_programs(0) - 1)
    def _():
        inv_n = 1.0 / float(n_rows)
        mean = sum_sc[...] * inv_n
        # biased variance, exactly what PyTorch BatchNorm1d uses to normalize in train()
        var = jnp.maximum(sq_sc[...] * inv_n - mean * mean, 0.0)
        s = gamma_ref[...] * jax.lax.rsqrt(var + eps)
        scale_ref[...] = s
        shift_ref[...] = beta_ref[...] - mean * s


def bn_stats(x2d, gamma, beta, *, eps=1e-5):
    n, d = x2d.shape
    rt = n
    for cand in (2048, 1024, 512, 256, 128, 64, 32, 16, 8):
        if n % cand == 0:
            rt = cand
            break
    kernel = functools.partial(bn_stats_kernel, n_rows=n, eps=eps)
    grid_spec = pltpu.PrefetchScalarGridSpec(
        num_scalar_prefetch=0,
        grid=(n // rt,),
        in_specs=[
            pl.BlockSpec((rt, d), lambda r: (r, 0)),
            pl.BlockSpec((1, d), lambda r: (0, 0)),
            pl.BlockSpec((1, d), lambda r: (0, 0)),
        ],
        out_specs=[
            pl.BlockSpec((1, d), lambda r: (0, 0)),
            pl.BlockSpec((1, d), lambda r: (0, 0)),
        ],
        scratch_shapes=[
            pltpu.VMEM((1, d), jnp.float32),
            pltpu.VMEM((1, d), jnp.float32),
        ],
    )
    return pl.pallas_call(
        kernel,
        grid_spec=grid_spec,
        out_shape=(jax.ShapeDtypeStruct((1, d), jnp.float32),
                   jax.ShapeDtypeStruct((1, d), jnp.float32)),
        compiler_params=pltpu.CompilerParams(dimension_semantics=("arbitrary",)),
    )(x2d, gamma, beta)


# ----------------------------------------------------------------------------
# Kernel 2: fused BN-apply + Linear/ReLU + LSTM input projection + recurrence
#           + O=1 value head.  Grid = (batch tiles [parallel], time blocks [arbitrary]).
# ----------------------------------------------------------------------------
def lstm_fused_kernel(x_ref, scale_ref, shift_ref, w1_ref, b1_ref, wih_ref,
                      bl_ref, whh_ref, w2_ref, b2_ref, h0_ref, c0_ref,
                      v_ref, hn_ref, cn_ref, h_sc, c_sc,
                      *, hidden, tt, t_real, n_tblocks):
    tb = pl.program_id(1)

    @pl.when(tb == 0)
    def _():
        h_sc[...] = h0_ref[...].astype(jnp.float32)
        c_sc[...] = c0_ref[...].astype(jnp.float32)

    bt = x_ref.shape[0]
    d = x_ref.shape[2]
    H = hidden

    # ---- per-block feedforward: BN apply + Linear/ReLU + LSTM input projection -------------
    # (hoisted out of the per-step recurrence; bf16 operands on the MXU, f32 accumulate)
    x = x_ref[...].reshape(bt * tt, d).astype(jnp.float32)
    xn = x * scale_ref[...] + shift_ref[...]
    y1 = jnp.maximum(
        jnp.dot(xn.astype(jnp.bfloat16), w1_ref[...],
                preferred_element_type=jnp.float32) + b1_ref[...],
        0.0)                                                     # (bt*tt, H1)
    gx = jnp.dot(y1.astype(jnp.bfloat16), wih_ref[...],
                 preferred_element_type=jnp.float32) + bl_ref[...]   # (bt*tt, 4H)
    gx = gx.reshape(bt, tt, 4 * H)

    # ---- recurrence (gate order i, f, g, o) -------------------------------------------------
    whh = whh_ref[...]                                           # (H, 4H) bf16, fetched once
    w2b = jnp.broadcast_to(w2_ref[...], (bt, H))                 # hoisted broadcast
    b2v = b2_ref[...]                                            # (1, 1), hoisted load
    h = h_sc[...]
    c = c_sc[...]

    rem = t_real - (n_tblocks - 1) * tt      # number of valid steps in the last time block
    for i in range(tt):                      # bounded static unroll (tt <= 16)
        gates = gx[:, i, :] + jnp.dot(h.astype(jnp.bfloat16), whh,
                                      preferred_element_type=jnp.float32)
        ig = jax.nn.sigmoid(gates[:, 0 * H:1 * H])
        fg = jax.nn.sigmoid(gates[:, 1 * H:2 * H])
        gg = jnp.tanh(gates[:, 2 * H:3 * H])
        og = jax.nn.sigmoid(gates[:, 3 * H:4 * H])
        c_new = fg * c + ig * gg
        h_new = og * jnp.tanh(c_new)
        if i < rem:
            h, c = h_new, c_new
        else:
            # only the last time block contains padded steps; freeze h/c there
            keep = jnp.where(tb < n_tblocks - 1, 1.0, 0.0)
            h = keep * h_new + (1.0 - keep) * h
            c = keep * c_new + (1.0 - keep) * c
        # Fused output head (O=1): VPU multiply + lane reduction; stores land in the
        # VMEM-resident (1, bt, tt) output block and DMA to HBM once per grid step.
        v = jnp.sum(h_new * w2b, axis=-1, keepdims=True) + b2v   # (bt, 1)
        v_ref[0, :, i:i + 1] = v.astype(v_ref.dtype)

    h_sc[...] = h
    c_sc[...] = c

    @pl.when(tb == n_tblocks - 1)
    def _():
        hn_ref[...] = h.astype(hn_ref.dtype)
        cn_ref[...] = c.astype(cn_ref.dtype)


def lstm_fused(x_p, scale, shift, params, h0, c0, *, t_real):
    """x_p: (B, T_pad, D) zero-padded along time.  Returns values laid out as
    (n_time_blocks, B, TT) plus h_n, c_n of shape (B, H)."""
    B, t_pad, D = x_p.shape
    H = params["whh_t"].shape[0]
    H1 = params["w1"].shape[1]

    TT = 16 if t_pad % 16 == 0 else 8        # bounded time block (t_pad is a multiple of 8)
    nb = t_pad // TT
    Bt = B // 2 if (B % 16 == 0) else B      # >=2 batch tiles only when they stay sublane-aligned
    n_btiles = B // Bt

    kernel = functools.partial(lstm_fused_kernel, hidden=H, tt=TT,
                               t_real=t_real, n_tblocks=nb)

    grid_spec = pltpu.PrefetchScalarGridSpec(
        num_scalar_prefetch=0,
        grid=(n_btiles, nb),
        in_specs=[
            pl.BlockSpec((Bt, TT, D), lambda bi, tb: (bi, tb, 0)),   # raw x block
            pl.BlockSpec((1, D), lambda bi, tb: (0, 0)),             # BN scale
            pl.BlockSpec((1, D), lambda bi, tb: (0, 0)),             # BN shift
            pl.BlockSpec((D, H1), lambda bi, tb: (0, 0)),            # w1 (bf16)
            pl.BlockSpec((1, H1), lambda bi, tb: (0, 0)),            # b1
            pl.BlockSpec((H1, 4 * H), lambda bi, tb: (0, 0)),        # W_ih^T (bf16)
            pl.BlockSpec((1, 4 * H), lambda bi, tb: (0, 0)),         # b_ih + b_hh
            pl.BlockSpec((H, 4 * H), lambda bi, tb: (0, 0)),         # W_hh^T (bf16)
            pl.BlockSpec((1, H), lambda bi, tb: (0, 0)),             # w2 (head)
            pl.BlockSpec((1, 1), lambda bi, tb: (0, 0)),             # b2
            pl.BlockSpec((Bt, H), lambda bi, tb: (bi, 0)),           # h0
            pl.BlockSpec((Bt, H), lambda bi, tb: (bi, 0)),           # c0
        ],
        out_specs=[
            pl.BlockSpec((1, Bt, TT), lambda bi, tb: (tb, bi, 0)),   # values, lane-dense blocks
            pl.BlockSpec((Bt, H), lambda bi, tb: (bi, 0)),           # h_n
            pl.BlockSpec((Bt, H), lambda bi, tb: (bi, 0)),           # c_n
        ],
        scratch_shapes=[
            pltpu.VMEM((Bt, H), jnp.float32),
            pltpu.VMEM((Bt, H), jnp.float32),
        ],
    )
    return pl.pallas_call(
        kernel,
        grid_spec=grid_spec,
        out_shape=(
            jax.ShapeDtypeStruct((nb, B, TT), jnp.float32),
            jax.ShapeDtypeStruct((B, H), jnp.float32),
            jax.ShapeDtypeStruct((B, H), jnp.float32),
        ),
        compiler_params=pltpu.CompilerParams(
            dimension_semantics=("parallel", "arbitrary"),
            vmem_limit_bytes=64 * 1024 * 1024,
        ),
    )(x_p, scale, shift, params["w1"], params["b1"], params["wih_t"],
      params["b_lstm"], params["whh_t"], params["w2"], params["b2"], h0, c0)


# ----------------------------------------------------------------------------
# Parameter init (deterministic, PyTorch-like uniform ranges; matmul weights bf16)
# ----------------------------------------------------------------------------
def init_params(key, value_input_dim, fc_hidden_dim, lstm_hidden_dim, output_dim):
    assert output_dim == 1, "fused head assumes output_dim == 1 (as in the reference module)"
    ks = jax.random.split(key, 8)
    D, H1, H = value_input_dim, fc_hidden_dim, lstm_hidden_dim

    def u(k, shape, bound):
        return jax.random.uniform(k, shape, jnp.float32, -bound, bound)

    return {
        # BatchNorm1d(D): affine init gamma=1, beta=0 (training-mode batch stats in forward)
        "bn_gamma": jnp.ones((1, D), jnp.float32),
        "bn_beta": jnp.zeros((1, D), jnp.float32),
        # Linear(D, H1): stored transposed (D, H1), bf16 for the MXU
        "w1": u(ks[0], (D, H1), 1.0 / jnp.sqrt(D)).astype(jnp.bfloat16),
        "b1": u(ks[1], (1, H1), 1.0 / jnp.sqrt(D)),
        # LSTM(H1, H): stored transposed (in, 4H), bf16; gate order i, f, g, o
        "wih_t": u(ks[2], (H1, 4 * H), 1.0 / jnp.sqrt(H)).astype(jnp.bfloat16),
        "whh_t": u(ks[3], (H, 4 * H), 1.0 / jnp.sqrt(H)).astype(jnp.bfloat16),
        "b_lstm": u(ks[4], (1, 4 * H), 1.0 / jnp.sqrt(H))
                  + u(ks[5], (1, 4 * H), 1.0 / jnp.sqrt(H)),        # b_ih + b_hh
        # Linear(H, 1): stored as a (1, H) row (VPU mul + lane reduce in-kernel)
        "w2": u(ks[6], (1, H), 1.0 / jnp.sqrt(H)),
        "b2": u(ks[7], (1, 1), 1.0 / jnp.sqrt(H)),
    }


# ----------------------------------------------------------------------------
# Full Critic forward
# ----------------------------------------------------------------------------
def critic_forward(x, params, hidden_state=None):
    """x: (B, T, value_input_dim) float32. Returns (values (B,T,1), (h_n, c_n))."""
    B, T, D = x.shape
    H = params["whh_t"].shape[0]

    # Stage 1: BN batch statistics over the real B*T rows (unpadded).
    scale, shift = bn_stats(x.reshape(B * T, D), params["bn_gamma"], params["bn_beta"])

    if hidden_state is None:
        h0 = jnp.zeros((B, H), jnp.float32)
        c0 = jnp.zeros((B, H), jnp.float32)
    else:
        h0 = hidden_state[0].reshape(B, H).astype(jnp.float32)
        c0 = hidden_state[1].reshape(B, H).astype(jnp.float32)

    # Pad time to a multiple of 8 so the recurrent kernel keeps bounded, pipelined blocks.
    t_pad = ((T + 7) // 8) * 8
    x_p = x if t_pad == T else jnp.pad(x, ((0, 0), (0, t_pad - T), (0, 0)))

    # Stage 2: fused BN-apply + FC/ReLU + projection + recurrence + value head.
    vals3, hn, cn = lstm_fused(x_p, scale, shift, params, h0, c0, t_real=T)

    # (nb, B, TT) -> (B, T, 1): tiny host-side rearrangement of the value tensor only.
    nb, _, tt = vals3.shape
    values = jnp.transpose(vals3, (1, 0, 2)).reshape(B, nb * tt)[:, :T].reshape(B, T, 1)

    # PyTorch hidden_state shapes: (num_layers=1, B, H)
    return values, (hn[None, :, :], cn[None, :, :])


if __name__ == "__main__":
    # Small shapes consistent with the module (H a multiple of 128 keeps gate slices
    # lane-aligned); T=20 exercises time padding, multi-block carry and tail masking.
    B, T = 2, 20
    VALUE_INPUT_DIM = 32
    FC_HIDDEN_DIM = 128
    LSTM_HIDDEN_DIM = 128
    OUTPUT_DIM = 1

    key = jax.random.PRNGKey(0)
    kx, kp = jax.random.split(key)
    x = jax.random.normal(kx, (B, T, VALUE_INPUT_DIM), jnp.float32)
    params = init_params(kp, VALUE_INPUT_DIM, FC_HIDDEN_DIM, LSTM_HIDDEN_DIM, OUTPUT_DIM)

    values, (h_n, c_n) = critic_forward(x, params)
    jax.block_until_ready((values, h_n, c_n))

    assert values.shape == (B, T, OUTPUT_DIM)
    assert h_n.shape == (1, B, LSTM_HIDDEN_DIM)
    assert c_n.shape == (1, B, LSTM_HIDDEN_DIM)
    assert bool(jnp.all(jnp.isfinite(values)))
    assert bool(jnp.all(jnp.isfinite(h_n))) and bool(jnp.all(jnp.isfinite(c_n)))
    print("KERNEL_OK")
</pallas_src>

<mosaic_0001>
module attributes {stable_mosaic.version = 11 : i64} {
  func.func @bn_stats_kernel(%arg0: i32, %arg1: memref<8x32xf32, #tpu.memory_space<vmem>>, %arg2: memref<1x32xf32, #tpu.memory_space<vmem>>, %arg3: memref<1x32xf32, #tpu.memory_space<vmem>>, %arg4: memref<1x32xf32, #tpu.memory_space<vmem>>, %arg5: memref<1x32xf32, #tpu.memory_space<vmem>>, %arg6: memref<1x32xf32, #tpu.memory_space<vmem>>, %arg7: memref<1x32xf32, #tpu.memory_space<vmem>>) attributes {dimension_semantics = [#tpu.dimension_semantics<arbitrary>], iteration_bounds = array<i64: 5>, scalar_prefetch = 0 : i64, scratch_operands = 2 : i64, tpu.core_type = #tpu.core_type<tc>, window_params = [{transform_indices = @transform_0, window_bounds = array<i64: 8, 32>}, {pipeline_mode = #tpu.pipeline_mode<synchronous>, transform_indices = @transform_1, window_bounds = array<i64: 1, 32>}, {pipeline_mode = #tpu.pipeline_mode<synchronous>, transform_indices = @transform_2, window_bounds = array<i64: 1, 32>}, {pipeline_mode = #tpu.pipeline_mode<synchronous>, transform_indices = @transform_3, window_bounds = array<i64: 1, 32>}, {pipeline_mode = #tpu.pipeline_mode<synchronous>, transform_indices = @transform_4, window_bounds = array<i64: 1, 32>}]} {
    %c0_i32 = arith.constant 0 : i32
    %0 = arith.cmpi eq, %arg0, %c0_i32 : i32
    %1 = arith.extui %0 : i1 to i32
    %c0_i32_0 = arith.constant 0 : i32
    %2 = arith.cmpi ne, %1, %c0_i32_0 : i32
    scf.if %2 {
      %cst_12 = arith.constant 0.000000e+00 : f32
      %18 = vector.broadcast %cst_12 : f32 to vector<1x32xf32>
      %c0_13 = arith.constant 0 : index
      %c0_14 = arith.constant 0 : index
      %19 = vector.load %arg6[%c0_13, %c0_14] : memref<1x32xf32, #tpu.memory_space<vmem>>, vector<1x32xf32>
      tpu.vector_store %arg6[%c0_13, %c0_14], %18 {strides = array<i32>} : memref<1x32xf32, #tpu.memory_space<vmem>>, vector<1x32xf32>,
      %cst_15 = arith.constant 0.000000e+00 : f32
      %20 = vector.broadcast %cst_15 : f32 to vector<1x32xf32>
      %c0_16 = arith.constant 0 : index
      %c0_17 = arith.constant 0 : index
      %21 = vector.load %arg7[%c0_16, %c0_17] : memref<1x32xf32, #tpu.memory_space<vmem>>, vector<1x32xf32>
      tpu.vector_store %arg7[%c0_16, %c0_17], %20 {strides = array<i32>} : memref<1x32xf32, #tpu.memory_space<vmem>>, vector<1x32xf32>,
    } else {
    }
    %c0 = arith.constant 0 : index
    %c0_1 = arith.constant 0 : index
    %3 = vector.load %arg1[%c0, %c0_1] : memref<8x32xf32, #tpu.memory_space<vmem>>, vector<8x32xf32>
    %c0_2 = arith.constant 0 : index
    %c0_3 = arith.constant 0 : index
    %4 = vector.load %arg6[%c0_2, %c0_3] : memref<1x32xf32, #tpu.memory_space<vmem>>, vector<1x32xf32>
    %cst = arith.constant dense<0.000000e+00> : vector<32xf32>
    %5 = vector.multi_reduction <add>, %3, %cst [0] : vector<8x32xf32> to vector<32xf32>
    %6 = vector.shape_cast %5 : vector<32xf32> to vector<1x32xf32>
    %7 = arith.addf %4, %6 : vector<1x32xf32>
    %c0_4 = arith.constant 0 : index
    %c0_5 = arith.constant 0 : index
    %8 = vector.load %arg6[%c0_4, %c0_5] : memref<1x32xf32, #tpu.memory_space<vmem>>, vector<1x32xf32>
    tpu.vector_store %arg6[%c0_4, %c0_5], %7 {strides = array<i32>} : memref<1x32xf32, #tpu.memory_space<vmem>>, vector<1x32xf32>,
    %c0_6 = arith.constant 0 : index
    %c0_7 = arith.constant 0 : index
    %9 = vector.load %arg7[%c0_6, %c0_7] : memref<1x32xf32, #tpu.memory_space<vmem>>, vector<1x32xf32>
    %10 = arith.mulf %3, %3 : vector<8x32xf32>
    %cst_8 = arith.constant dense<0.000000e+00> : vector<32xf32>
    %11 = vector.multi_reduction <add>, %10, %cst_8 [0] : vector<8x32xf32> to vector<32xf32>
    %12 = vector.shape_cast %11 : vector<32xf32> to vector<1x32xf32>
    %13 = arith.addf %9, %12 : vector<1x32xf32>
    %c0_9 = arith.constant 0 : index
    %c0_10 = arith.constant 0 : index
    %14 = vector.load %arg7[%c0_9, %c0_10] : memref<1x32xf32, #tpu.memory_space<vmem>>, vector<1x32xf32>
    tpu.vector_store %arg7[%c0_9, %c0_10], %13 {strides = array<i32>} : memref<1x32xf32, #tpu.memory_space<vmem>>, vector<1x32xf32>,
    %c4_i32 = arith.constant 4 : i32
    %15 = arith.cmpi eq, %arg0, %c4_i32 : i32
    %16 = arith.extui %15 : i1 to i32
    %c0_i32_11 = arith.constant 0 : i32
    %17 = arith.cmpi ne, %16, %c0_i32_11 : i32
    scf.if %17 {
      %c0_12 = arith.constant 0 : index
      %c0_13 = arith.constant 0 : index
      %18 = vector.load %arg6[%c0_12, %c0_13] : memref<1x32xf32, #tpu.memory_space<vmem>>, vector<1x32xf32>
      %cst_14 = arith.constant 2.500000e-02 : f32
      %19 = vector.broadcast %cst_14 : f32 to vector<1x32xf32>
      %20 = arith.mulf %18, %19 : vector<1x32xf32>
      %c0_15 = arith.constant 0 : index
      %c0_16 = arith.constant 0 : index
      %21 = vector.load %arg7[%c0_15, %c0_16] : memref<1x32xf32, #tpu.memory_space<vmem>>, vector<1x32xf32>
      %cst_17 = arith.constant 2.500000e-02 : f32
      %22 = vector.broadcast %cst_17 : f32 to vector<1x32xf32>
      %23 = arith.mulf %21, %22 : vector<1x32xf32>
      %24 = arith.mulf %20, %20 : vector<1x32xf32>
      %25 = arith.subf %23, %24 : vector<1x32xf32>
      %cst_18 = arith.constant 0.000000e+00 : f32
      %26 = vector.broadcast %cst_18 : f32 to vector<1x32xf32>
      %27 = arith.maximumf %25, %26 : vector<1x32xf32>
      %c0_19 = arith.constant 0 : index
      %c0_20 = arith.constant 0 : index
      %28 = vector.load %arg2[%c0_19, %c0_20] : memref<1x32xf32, #tpu.memory_space<vmem>>, vector<1x32xf32>
      %cst_21 = arith.constant 9.99999974E-6 : f32
      %29 = vector.broadcast %cst_21 : f32 to vector<1x32xf32>
      %30 = arith.addf %27, %29 : vector<1x32xf32>
      %31 = math.rsqrt %30 : vector<1x32xf32>
      %32 = arith.mulf %28, %31 : vector<1x32xf32>
      %c0_22 = arith.constant 0 : index
      %c0_23 = arith.constant 0 : index
      %33 = vector.load %arg4[%c0_22, %c0_23] : memref<1x32xf32, #tpu.memory_space<vmem>>, vector<1x32xf32>
      tpu.vector_store %arg4[%c0_22, %c0_23], %32 {strides = array<i32>} : memref<1x32xf32, #tpu.memory_space<vmem>>, vector<1x32xf32>,
      %c0_24 = arith.constant 0 : index
      %c0_25 = arith.constant 0 : index
      %34 = vector.load %arg3[%c0_24, %c0_25] : memref<1x32xf32, #tpu.memory_space<vmem>>, vector<1x32xf32>
      %35 = arith.mulf %20, %32 : vector<1x32xf32>
      %36 = arith.subf %34, %35 : vector<1x32xf32>
      %c0_26 = arith.constant 0 : index
      %c0_27 = arith.constant 0 : index
      %37 = vector.load %arg5[%c0_26, %c0_27] : memref<1x32xf32, #tpu.memory_space<vmem>>, vector<1x32xf32>
      tpu.vector_store %arg5[%c0_26, %c0_27], %36 {strides = array<i32>} : memref<1x32xf32, #tpu.memory_space<vmem>>, vector<1x32xf32>,
    } else {
    }
    return
  }
  func.func @transform_0(%arg0: i32) -> (i32, i32) {
    %c0_i32 = arith.constant 0 : i32
    %c0_i32_0 = arith.constant 0 : i32
    return %arg0, %c0_i32 : i32, i32
  }
  func.func @transform_1(%arg0: i32) -> (i32, i32) {
    %c0_i32 = arith.constant 0 : i32
    %c0_i32_0 = arith.constant 0 : i32
    %c0_i32_1 = arith.constant 0 : i32
    return %c0_i32, %c0_i32_0 : i32, i32
  }
  func.func @transform_2(%arg0: i32) -> (i32, i32) {
    %c0_i32 = arith.constant 0 : i32
    %c0_i32_0 = arith.constant 0 : i32
    %c0_i32_1 = arith.constant 0 : i32
    return %c0_i32, %c0_i32_0 : i32, i32
  }
  func.func @transform_3(%arg0: i32) -> (i32, i32) {
    %c0_i32 = arith.constant 0 : i32
    %c0_i32_0 = arith.constant 0 : i32
    %c0_i32_1 = arith.constant 0 : i32
    return %c0_i32, %c0_i32_0 : i32, i32
  }
  func.func @transform_4(%arg0: i32) -> (i32, i32) {
    %c0_i32 = arith.constant 0 : i32
    %c0_i32_0 = arith.constant 0 : i32
    %c0_i32_1 = arith.constant 0 : i32
    return %c0_i32, %c0_i32_0 : i32, i32
  }
}

</mosaic_0001>

<llo_original>
// kernel: tpu_custom_call.1
$region0: #{tpu_custom_call.1}
  #allocation0 [shape = 'u32[]', space=smem, size = 0x4, offset = 0x4, fixed_abs, tag = 'smem constant byte address 0x4 - core index']
  #allocation1 [shape = 'u32[72,128]{1,0:T(1,128)}', space=vmem, size = 0x9000, scoped, tag = 'internal scratch']
  #allocation2 [shape = 'f32[1,32]{1,0:T(1,128)}', space=vmem, size = 0x200, scoped, tag = 'scratch operand']
  #allocation3 [shape = 'f32[1,32]{1,0:T(1,128)}', space=vmem, size = 0x200, scoped, tag = 'scratch operand']
  %s0 = inlined_call_operand.vmem [shape: f32[40,32], index: 0, kind: input, shape index: {}]
  %s1 = inlined_call_operand.vmem [shape: f32[1,32], index: 1, kind: input, shape index: {}]
  %s2 = inlined_call_operand.vmem [shape: f32[1,32], index: 2, kind: input, shape index: {}]
  %s3 = inlined_call_operand.hbm [shape: f32[1,32], index: 3, kind: output, shape index: {0}]
  %s4 = inlined_call_operand.hbm [shape: f32[1,32], index: 4, kind: output, shape index: {1}]
  %5 = xla_tuple %s3, %s4
  %s6 = sld [smem:[#allocation0]]
  $region61: #{tpu_custom_call.1} parent=0
    _
  %s8 = ssub.s32 1, %s6
  %s9 = scalar_select 0, %s8, %s6
  $region1: #{tpu_custom_call.1} parent=0
    #allocation4 [shape = 'u8[512]{0}', space=vmem, size = 0x400, scoped, tag = 'output window, operand 0, single buffered']
    #allocation5 [shape = 's32[2]{0}', space=sflag, size = 0x8, scoped, tag = 'scoped memory for tpu_custom_call.1']
    #allocation6 [shape = 'u8[512]{0}', space=vmem, size = 0x400, scoped, tag = 'output window, operand 1, single buffered']
    #allocation7 [shape = 's32[1]{0}', space=sflag, size = 0x4, scoped, tag = 'scoped memory for tpu_custom_call.1']
    %10 = vsyncpa [#allocation5], 0
    %11 = vsyncpa [#allocation7], 0
    loop: start=0, step=1, limit=7
    $region2: #{tpu_custom_call.1} parent=1 // loop_pre_header
      _
    $region3: #{tpu_custom_call.1} parent=1 // loop_header
      %s13 = sphi 0, %s17
      %p14 = scmp.ge.s32.totalorder %s13, 7
      %s23 = sphi 0, %s25
      %s26 = sphi 0, %s23
      %s27 = sphi 0, %s26
      %s43 = sphi 0, %s27
      %s47 = sphi 0, %s47
      %s49 = sphi 0, %s47
      %s50 = sphi 0, %s49
      %s64 = sphi 0, %s50
      %s68 = sphi 0, %s68
      %s70 = sphi 0, %s68
      %s71 = sphi 0, %s70
      %s85 = sphi 0, %s71
      %s89 = sphi 0, %s89
      %s91 = sphi 0, %s89
      %s92 = sphi 0, %s91
      %s106 = sphi 0, %s92
      %s110 = sphi 0, %s110
      %s112 = sphi 0, %s110
      %s113 = sphi 0, %s112
      %s127 = sphi 0, %s113
    $region4: #{tpu_custom_call.1} parent=1 // loop_header_branch
      %16 = sbr.rel (%p14) target = $region8
    $region5: #{tpu_custom_call.1} parent=1 // loop_body
      %s18 = ssub.s32 %s13, 1
      %s19 = ssub.s32 %s13, 2
      %s20 = sadd.s32 %s13, 1
      %s21 = ssub.s32 %s13, %s20
      %p22 = scmp.eq.s32.totalorder %s21, 0
      %s24 = sadd.s32 %s23, 1
      %s25 = scalar_select %p22, %s23, %s24
      %p28 = pneg %p22
      %p29 = scmp.eq.s32.totalorder %s13, 4
      %p30 = por %p28, %p29
      %p31 = scmp.ne.s32.totalorder %s23, %s26
      %p32 = scmp.eq.s32.totalorder %s13, 0
      %p33 = por %p31, %p32
      %p34 = scmp.ne.s32.totalorder %s23, %s26
      %p35 = scmp.eq.s32.totalorder %s18, 4
      %p36 = por %p34, %p35
      %p37 = scmp.ne.s32.totalorder %s26, %s27
      %p38 = scmp.eq.s32.totalorder %s18, 0
      %p39 = por %p37, %p38
      %p40 = scmp.ne.s32.totalorder %s26, %s27
      %p41 = scmp.eq.s32.totalorder %s19, 4
      %p42 = por %p40, %p41
      %p44 = scmp.ne.s32.totalorder %s27, %s43
      %p45 = scmp.eq.s32.totalorder %s19, 0
      %p46 = por %p44, %p45
      %s48 = sadd.s32 %s47, 1
      %p51 = scmp.eq.s32.totalorder %s13, 4
      %p52 = scmp.ne.s32.totalorder %s47, %s49
      %p53 = scmp.eq.s32.totalorder %s13, 0
      %p54 = por %p52, %p53
      %p55 = scmp.ne.s32.totalorder %s47, %s49
      %p56 = scmp.eq.s32.totalorder %s18, 4
      %p57 = por %p55, %p56
      %p58 = scmp.ne.s32.totalorder %s49, %s50
      %p59 = scmp.eq.s32.totalorder %s18, 0
      %p60 = por %p58, %p59
      %p61 = scmp.ne.s32.totalorder %s49, %s50
      %p62 = scmp.eq.s32.totalorder %s19, 4
      %p63 = por %p61, %p62
      %p65 = scmp.ne.s32.totalorder %s50, %s64
      %p66 = scmp.eq.s32.totalorder %s19, 0
      %p67 = por %p65, %p66
      %s69 = sadd.s32 %s68, 1
      %p72 = scmp.eq.s32.totalorder %s13, 4
      %p73 = scmp.ne.s32.totalorder %s68, %s70
      %p74 = scmp.eq.s32.totalorder %s13, 0
      %p75 = por %p73, %p74
      %p76 = scmp.ne.s32.totalorder %s68, %s70
      %p77 = scmp.eq.s32.totalorder %s18, 4
      %p78 = por %p76, %p77
      %p79 = scmp.ne.s32.totalorder %s70, %s71
      %p80 = scmp.eq.s32.totalorder %s18, 0
      %p81 = por %p79, %p80
      %p82 = scmp.ne.s32.totalorder %s70, %s71
      %p83 = scmp.eq.s32.totalorder %s19, 4
      %p84 = por %p82, %p83
      %p86 = scmp.ne.s32.totalorder %s71, %s85
      %p87 = scmp.eq.s32.totalorder %s19, 0
      %p88 = por %p86, %p87
      %s90 = sadd.s32 %s89, 1
      %p93 = scmp.eq.s32.totalorder %s13, 4
      %p94 = scmp.ne.s32.totalorder %s89, %s91
      %p95 = scmp.eq.s32.totalorder %s13, 0
      %p96 = por %p94, %p95
      %p97 = scmp.ne.s32.totalorder %s89, %s91
      %p98 = scmp.eq.s32.totalorder %s18, 4
      %p99 = por %p97, %p98
      %p100 = scmp.ne.s32.totalorder %s91, %s92
      %p101 = scmp.eq.s32.totalorder %s18, 0
      %p102 = por %p100, %p101
      %p103 = scmp.ne.s32.totalorder %s91, %s92
      %p104 = scmp.eq.s32.totalorder %s19, 4
      %p105 = por %p103, %p104
      %p107 = scmp.ne.s32.totalorder %s92, %s106
      %p108 = scmp.eq.s32.totalorder %s19, 0
      %p109 = por %p107, %p108
      %s111 = sadd.s32 %s110, 1
      %p114 = scmp.eq.s32.totalorder %s13, 4
      %p115 = scmp.ne.s32.totalorder %s110, %s112
      %p116 = scmp.eq.s32.totalorder %s13, 0
      %p117 = por %p115, %p116
      %p118 = scmp.ne.s32.totalorder %s110, %s112
      %p119 = scmp.eq.s32.totalorder %s18, 4
      %p120 = por %p118, %p119
      %p121 = scmp.ne.s32.totalorder %s112, %s113
      %p122 = scmp.eq.s32.totalorder %s18, 0
      %p123 = por %p121, %p122
      %p124 = scmp.ne.s32.totalorder %s112, %s113
      %p125 = scmp.eq.s32.totalorder %s19, 4
      %p126 = por %p124, %p125
      %p128 = scmp.ne.s32.totalorder %s113, %s127
      %p129 = scmp.eq.s32.totalorder %s19, 0
      %p130 = por %p128, %p129
      %p131 = scmp.le.s32.totalorder 1, %s13
      %p132 = scmp.lt.s32.totalorder %s13, 6
      %p133 = pnand %p131, %p132
      %p134 = pneg %p133
      // Predicated region
      $region9: #{tpu_custom_call.1} parent=5 // pred_check
        _
      $region10: #{tpu_custom_call.1} parent=5 // pred_check_branch
        %136 = sbr.rel (%p133) target = $region12
      $region11: #{tpu_custom_call.1} parent=5 // pred_region
        %s137 = ssub.s32 %s13, 1
        // Predicated region
        $region13: #{tpu_custom_call.1} parent=11 // pred_check
          %p138 = pneg %p60
        $region14: #{tpu_custom_call.1} parent=11 // pred_check_branch
          %140 = sbr.rel (%p138) target = $region16
        $region15: #{tpu_custom_call.1} parent=11 // pred_region
          _
        $region16: #{tpu_custom_call.1} parent=11 // pred_fallthru
          _
        // Predicated region
        $region17: #{tpu_custom_call.1} parent=11 // pred_check
          %p141 = pneg %p81
        $region18: #{tpu_custom_call.1} parent=11 // pred_check_branch
          %143 = sbr.rel (%p141) target = $region20
        $region19: #{tpu_custom_call.1} parent=11 // pred_region
          _
        $region20: #{tpu_custom_call.1} parent=11 // pred_fallthru
          _
      $region12: #{tpu_custom_call.1} parent=5 // pred_fallthru
        _
      %p144 = scmp.lt.s32.totalorder %s13, 5
      // Predicated region
      $region21: #{tpu_custom_call.1} parent=5 // pred_check
        %p145 = pneg %p144
      $region22: #{tpu_custom_call.1} parent=5 // pred_check_branch
        %147 = sbr.rel (%p145) target = $region24
      $region23: #{tpu_custom_call.1} parent=5 // pred_region
        // Predicated region
        $region25: #{tpu_custom_call.1} parent=23 // pred_check
          %p148 = pneg %p33
        $region26: #{tpu_custom_call.1} parent=23 // pred_check_branch
          %150 = sbr.rel (%p148) target = $region28
        $region27: #{tpu_custom_call.1} parent=23 // pred_region
          %p151 = scmp.lt.s32.totalorder %s13, 4
          %s152 = scalar_select %p151, %s13, 4
          %s153 = smul.addr %s152, 8
          %s154 = scalar_lea.vmem %s0, %s153
        $region28: #{tpu_custom_call.1} parent=23 // pred_fallthru
          _
      $region24: #{tpu_custom_call.1} parent=5 // pred_fallthru
        _
      %p155 = scmp.le.s32.totalorder 1, %s13
      %p156 = scmp.lt.s32.totalorder %s13, 6
      %p157 = pnand %p155, %p156
      %p158 = pneg %p157
      // Predicated region
      $region29: #{tpu_custom_call.1} parent=5 // pred_check
        _
      $region30: #{tpu_custom_call.1} parent=5 // pred_check_branch
        %160 = sbr.rel (%p157) target = $region32
      $region31: #{tpu_custom_call.1} parent=5 // pred_region
        %s161 = ssub.s32 %s13, 1
        %p162 = scmp.lt.s32.totalorder %s18, 4
        %s163 = scalar_select %p162, %s18, 4
        %s164 = smul.addr %s163, 8
        %s165 = scalar_lea.vmem %s0, %s164
        %p166 = pneg %p39
        %p167 = pneg %p36
        %p168 = pneg %p60
        %p169 = pneg %p57
        %p170 = pneg %p81
        %p171 = pneg %p78
        %p172 = pneg %p102
        %p173 = pneg %p99
        %p174 = pneg %p123
        %p175 = pneg %p120
        %p176 = scmp.lt.s32.totalorder %s18, 4
        %s177 = scalar_select %p176, %s18, 4
        %s178 = smul.addr %s177, 8
        %s179 = scalar_lea.vmem %s0, %s178
        %p180 = scmp.eq.s32.totalorder %s18, 0
        // Predicated region
        $region33: #{tpu_custom_call.1} parent=31 // pred_check
          %p181 = pneg %p180
        $region34: #{tpu_custom_call.1} parent=31 // pred_check_branch
          %183 = sbr.rel (%p181) target = $region36
        $region35: #{tpu_custom_call.1} parent=31 // pred_region
          %vm184 = vcmask 253952
          %185 = vst.msk [vmem:[#allocation2] sm:$0x1] %vm184, 0.0
          %186 = vst.msk [vmem:[#allocation3] sm:$0x1] %vm184, 0.0
        $region36: #{tpu_custom_call.1} parent=31 // pred_fallthru
          _
        %v187 = vld [vmem:[%s179] sm:$0xff]
        %v188 = vld [vmem:[#allocation2] sm:$0x1]
        %vm189 = vcmask 261120
        %v190 = vsel %vm189, %v187, 0.0
        %v191 = vrot.slane %v190, 4
        %v192 = vadd.f32 %v190, %v191
        %v193 = vrot.slane %v192, 2
        %v194 = vadd.f32 %v192, %v193
        %v195 = vrot.slane %v194, 1
        %v196 = vadd.f32 %v194, %v195
        %v197 = vadd.f32 %v188, %v196
        %vm198 = vcmask 253952
        %199 = vst.msk [vmem:[#allocation2] sm:$0x1] %vm198, %v197
        %v200 = vld [vmem:[#allocation3] sm:$0x1]
        %v201 = vmul.f32 %v187, %v187
        %v202 = vsel %vm189, %v201, 0.0
        %v203 = vrot.slane %v202, 4
        %v204 = vadd.f32 %v202, %v203
        %v205 = vrot.slane %v204, 2
        %v206 = vadd.f32 %v204, %v205
        %v207 = vrot.slane %v206, 1
        %v208 = vadd.f32 %v206, %v207
        %v209 = vadd.f32 %v200, %v208
        %210 = vst.msk [vmem:[#allocation3] sm:$0x1] %vm198, %v209
        %p211 = scmp.eq.s32.totalorder %s18, 4
        // Predicated region
        $region37: #{tpu_custom_call.1} parent=31 // pred_check
          %p212 = pneg %p211
        $region38: #{tpu_custom_call.1} parent=31 // pred_check_branch
          %214 = sbr.rel (%p212) target = $region40
        $region39: #{tpu_custom_call.1} parent=31 // pred_region
          %v215 = vld [vmem:[#allocation2] sm:$0x1]
          %v216 = vmul.f32 %v215, 0.025
          %v217 = vld [vmem:[#allocation3] sm:$0x1]
          %v218 = vmul.f32 %v217, 0.025
          %v219 = vmul.f32 %v216, %v216
          %v220 = vsub.f32 %v218, %v219
          %v221 = vmax.f32 %v220, 0.0
          %v222 = vld [vmem:[%s1] sm:$0x1]
          %v223 = vadd.f32 %v221, 1e-05
          %v224 = vrsqrt.pop %v223
          %v225 = vmul.f32 %v224, %v223
          %v226 = vmul.f32 %v225, %v224
          %v227 = vmul.f32 0.5, %v226
          %v228 = vsub.f32 1.5, %v227
          %v229 = vmul.f32 %v224, %v228
          %vm230 = vweird.f32 %v223
          %vm231 = vweird.f32 %v224
          %vm232 = vmor %vm230, %vm231
          %v233 = vsel %vm232, %v224, %v229
          %v234 = vmul.f32 %v222, %v233
          %235 = vst.msk [vmem:[#allocation4] sm:$0x1] %vm198, %v234
          %v236 = vld [vmem:[%s2] sm:$0x1]
          %v237 = vmul.f32 %v216, %v234
          %v238 = vsub.f32 %v236, %v237
          %239 = vst.msk [vmem:[#allocation6] sm:$0x1] %vm198, %v238
        $region40: #{tpu_custom_call.1} parent=31 // pred_fallthru
          _
        // Predicated region
        $region41: #{tpu_custom_call.1} parent=31 // pred_check
          %p240 = pneg %p99
        $region42: #{tpu_custom_call.1} parent=31 // pred_check_branch
          %242 = sbr.rel (%p240) target = $region44
        $region43: #{tpu_custom_call.1} parent=31 // pred_region
          %244 = vsyncadd [#allocation5], 0
          %s246 = sshll.u32 [#allocation4], 4
          %s247 = int_to_ptr.vmem [resolvable:$true] %s246
          %s248 = sshll.u32 %s3, 4
          %s249 = int_to_ptr.hbm [resolvable:$true] %s248
          %251 = dma.vmem_to_hbm [thread:$0]  %s247, 16, %s249, [#allocation5]
        $region44: #{tpu_custom_call.1} parent=31 // pred_fallthru
          _
        // Predicated region
        $region45: #{tpu_custom_call.1} parent=31 // pred_check
          %p252 = pneg %p120
        $region46: #{tpu_custom_call.1} parent=31 // pred_check_branch
          %254 = sbr.rel (%p252) target = $region48
        $region47: #{tpu_custom_call.1} parent=31 // pred_region
          %256 = vsyncadd [#allocation7], 0
          %s258 = sshll.u32 [#allocation6], 4
          %s259 = int_to_ptr.vmem [resolvable:$true] %s258
          %s260 = sshll.u32 %s4, 4
          %s261 = int_to_ptr.hbm [resolvable:$true] %s260
          %263 = dma.vmem_to_hbm [thread:$0]  %s259, 16, %s261, [#allocation7]
        $region48: #{tpu_custom_call.1} parent=31 // pred_fallthru
          _
        // Predicated region
        $region49: #{tpu_custom_call.1} parent=31 // pred_check
          %p264 = pneg %p99
        $region50: #{tpu_custom_call.1} parent=31 // pred_check_branch
          %266 = sbr.rel (%p264) target = $region52
        $region51: #{tpu_custom_call.1} parent=31 // pred_region
          %268 = dma.done [#allocation5], 16
        $region52: #{tpu_custom_call.1} parent=31 // pred_fallthru
          _
        // Predicated region
        $region53: #{tpu_custom_call.1} parent=31 // pred_check
          %p269 = pneg %p120
        $region54: #{tpu_custom_call.1} parent=31 // pred_check_branch
          %271 = sbr.rel (%p269) target = $region56
        $region55: #{tpu_custom_call.1} parent=31 // pred_region
          %273 = dma.done [#allocation7], 16
        $region56: #{tpu_custom_call.1} parent=31 // pred_fallthru
          _
      $region32: #{tpu_custom_call.1} parent=5 // pred_fallthru
        _
      %p274 = scmp.le.s32.totalorder 2, %s13
      // Predicated region
      $region57: #{tpu_custom_call.1} parent=5 // pred_check
        %p275 = pneg %p274
      $region58: #{tpu_custom_call.1} parent=5 // pred_check_branch
        %277 = sbr.rel (%p275) target = $region60
      $region59: #{tpu_custom_call.1} parent=5 // pred_region
        %s278 = ssub.s32 %s13, 2
      $region60: #{tpu_custom_call.1} parent=5 // pred_fallthru
        _
    $region6: #{tpu_custom_call.1} parent=1 // loop_footer
      %s17 = sadd.s32 1, %s13
    $region7: #{tpu_custom_call.1} parent=1 // loop_footer_branch
      %12 = sbr.rel target = $region3
    $region8: #{tpu_custom_call.1} parent=1 // loop_exit
      _
    %279 = vsyncpa [#allocation5], 1
    %s280 = scalar_lea.sflag [#allocation5], 1
    %281 = vsyncpa %s280, 1
    %282 = vsyncpa [#allocation7], 1

</llo_original>
